<compile_context>
chip_gen: v5e
topology: v5e:2x2
jax: 0.10.0
libtpu: 0.0.40
codegen_flags: <defaults>
</compile_context>

<pallas_src>
import math

import jax
import jax.numpy as jnp
from jax.experimental import pallas as pl


# ----------------------------------------------------------------------------
# Small exact-f32 matmul helper (used inside the kernel AND by the self-check so
# both paths share the same numerics).
# ----------------------------------------------------------------------------
def _small_matmul(x, w):
    """[B, K] @ [K, M] via VPU broadcast-multiply + sublane reduce (exact f32)."""
    return jnp.sum(x[:, :, None] * w[None, :, :], axis=1)


# ----------------------------------------------------------------------------
# Fused Pallas kernel: the entire live forward path (enc-dec constant + gat2).
# ----------------------------------------------------------------------------
def _gat_fused_kernel(edge_attr_ref, edge_mask_ref, src_idx_ref, tgt_idx_ref,
                      enc_ref, wv_ref, wo_ref, w2_ref,
                      a_src_ref, a_tgt_ref, a_edge_ref, out_ref):
    B, S, E, _ = edge_attr_ref.shape
    N = out_ref.shape[2]

    em = edge_mask_ref[...]                      # [B,S,E] 1.0 where edge valid
    edge_attr = edge_attr_ref[...]               # [B,S,E,Ed] (zeroed where invalid)
    src_idx = src_idx_ref[...]                   # [B,S,E] int32 (may be -1)
    tgt_idx = tgt_idx_ref[...]                   # [B,S,E] int32 (may be -1)
    src_m = (src_idx >= 0).astype(jnp.float32)   # reference's src_mask
    tgt_m = (tgt_idx >= 0).astype(jnp.float32)   # reference's tgt_mask

    # enc-dec attention (length-1 KV => softmax == 1): per-batch constant row c,
    # then gat2's projection on broadcast(c) collapses to one row hc per batch.
    c = _small_matmul(_small_matmul(enc_ref[...], wv_ref[...]), wo_ref[...])  # [B,Emb]
    hc = _small_matmul(c, w2_ref[...])                                        # [B,D]

    # GAT attention coefficients: the src/tgt gathers all equal hc (every node row
    # of the input is c), zeroed by src_mask/tgt_mask exactly like the reference's
    # src/tgt buffers, so their contribution is a per-batch scalar times the mask.
    s_src = jnp.sum(hc[:, None, :] * a_src_ref[...][None, :, :],
                    axis=-1, keepdims=True)                                   # [B,1,1]
    s_tgt = jnp.sum(hc[:, None, :] * a_tgt_ref[...][None, :, :],
                    axis=-1, keepdims=True)                                   # [B,1,1]
    e_edge = jnp.sum(edge_attr * a_edge_ref[...][:, None, None, :], axis=-1)  # [B,S,E]
    e = src_m * s_src + tgt_m * s_tgt + e_edge
    e = jnp.where(e >= 0.0, e, 0.2 * e)                      # LeakyReLU(0.2)
    e = jnp.where(em > 0.0, e, -1e30)                        # masked_fill(-inf)
    row_any = jnp.max(em, axis=-1, keepdims=True) > 0.0
    e = jnp.where(row_any, e, 0.0)                           # all-masked rows -> 0
    m = jnp.max(e, axis=-1, keepdims=True)
    p = jnp.exp(e - m)
    alpha = p / jnp.sum(p, axis=-1, keepdims=True)           # softmax over edges

    # Scatter-add: both scatter targets (tgt for src-messages, src for tgt-messages)
    # carry the same message hc, so aggregation is hc times an alpha-weighted count.
    # Single combined one-hot, built in-register from the int32 indices.
    v_src = jnp.where(em > 0.0, src_idx, 0)                  # reference's valid_*_indices
    v_tgt = jnp.where(em > 0.0, tgt_idx, 0)
    iota_n = jax.lax.broadcasted_iota(jnp.int32, (B, S, E, N), 3)
    g_both = ((v_src[..., None] == iota_n).astype(jnp.float32)
              + (v_tgt[..., None] == iota_n).astype(jnp.float32))            # [B,S,E,N]
    w_agg = jnp.sum(alpha[..., None] * g_both, axis=2)                        # [B,S,N]

    z = w_agg[..., None] * hc[:, None, None, :]                               # [B,S,N,D]
    out_ref[...] = jnp.where(z > 0.0, z, jnp.exp(z) - 1.0)                    # ELU


# ----------------------------------------------------------------------------
# pallas_call wrapper: single invocation, whole-array VMEM blocks (no grid).
# ----------------------------------------------------------------------------
def gat_forward_fused(edge_attr, edge_mask_f, src_idx, tgt_idx, enc_row,
                      wv_ed, wo_ed, gat2_p):
    B, S, _, _ = edge_attr.shape
    N = S + 1
    D = gat2_p['W'].shape[1]
    return pl.pallas_call(
        _gat_fused_kernel,
        out_shape=jax.ShapeDtypeStruct((B, S, N, D), jnp.float32),
    )(edge_attr, edge_mask_f, src_idx, tgt_idx, enc_row,
      wv_ed, wo_ed, gat2_p['W'], gat2_p['a_src'], gat2_p['a_tgt'], gat2_p['a_edge'])


# ----------------------------------------------------------------------------
# Plain-JAX glue: expand_data (faithful port of GAT.expand_data) and param init.
# ----------------------------------------------------------------------------
def create_expand_mask(mask, fill=True):
    B, S = mask.shape
    if fill:
        seq_mask = jnp.tril(jnp.ones((S, S), dtype=bool))
    else:
        seq_mask = jnp.eye(S, dtype=bool)
    return mask[:, :, None] & seq_mask[None, :, :]


def expand_data(x, edge_index, edge_attr, unk_feature, mask):
    B, S, F = x.shape
    edge_dim = edge_attr.shape[-1]

    expand_mask = create_expand_mask(mask, fill=True)                 # [B,S,S]
    ex_x = jnp.broadcast_to(x[:, None, :, :], (B, S, S, F))
    ex_x = jnp.where(expand_mask[..., None], ex_x, 0.0)
    ex_x = jnp.concatenate([ex_x, jnp.zeros((B, S, 1, F), x.dtype)], axis=2)

    expand_diag_mask = create_expand_mask(mask, fill=False)
    expand_unk = jnp.where(expand_diag_mask[..., None],
                           unk_feature.reshape(1, 1, 1, -1),
                           jnp.zeros_like(unk_feature).reshape(1, 1, 1, -1))
    expand_unk = jnp.concatenate([jnp.zeros((B, S, 1, F), x.dtype), expand_unk], axis=2)
    expand_mask_node = jnp.concatenate([expand_mask[:, :, 0:1], expand_mask], axis=2)
    ex_x = ex_x + expand_unk

    edge_mask = mask
    src = jnp.roll(edge_index, shift=-1, axis=1)
    tgt = jnp.where(edge_mask,
                    jnp.broadcast_to(jnp.arange(1, S + 1, dtype=edge_index.dtype)[None, :],
                                     (B, S)),
                    jnp.array(-1, edge_index.dtype))
    ex_edge_mask = create_expand_mask(edge_mask, fill=True)           # [B,S,S]
    neg1 = jnp.array(-1, edge_index.dtype)
    ex_src = jnp.where(ex_edge_mask, jnp.broadcast_to(src[:, None, :], (B, S, S)), neg1)
    ex_tgt = jnp.where(ex_edge_mask, jnp.broadcast_to(tgt[:, None, :], (B, S, S)), neg1)
    ex_src = jnp.where(ex_edge_mask & (ex_src == -1), ex_tgt, ex_src)
    ex_edge_index = jnp.stack([ex_src, ex_tgt], axis=-1)              # [B,S,S,2]

    ex_edge_attr = jnp.broadcast_to(edge_attr[:, None, :, :], (B, S, S, edge_dim))
    ex_edge_attr = jnp.where(ex_edge_mask[..., None], ex_edge_attr, 0.0)
    return ex_x, ex_edge_index, ex_edge_attr, expand_mask_node, ex_edge_mask


def xavier_uniform(key, shape):
    fan_in, fan_out = shape[0], shape[1]
    limit = math.sqrt(6.0 / (fan_in + fan_out))
    return jax.random.uniform(key, shape, jnp.float32, -limit, limit)


class GATPallas:
    """Pallas port of the reference GAT module.

    All parameter groups of the reference are created (gat1, self_attention,
    enc_dec_attention, gat2) so the module mirrors the original, but only the
    ones that can reach the output (enc-dec Wv/Wo and gat2) are handed to the
    kernel -- see the kernel header for the dead-compute argument.
    """

    def __init__(self, embed_dim, edge_dim, n_heads=2, key=None):
        self.embed_dim, self.edge_dim = embed_dim, edge_dim
        self.n_heads, self.d_k = n_heads, embed_dim // n_heads
        keys = jax.random.split(key, 12)

        def gat_params(k1, k2):
            W = xavier_uniform(k1, (embed_dim, embed_dim))
            a = xavier_uniform(k2, (2 * embed_dim + edge_dim, 1))
            return dict(W=W,
                        a_src=a[:embed_dim, 0][None, :],
                        a_tgt=a[embed_dim:2 * embed_dim, 0][None, :],
                        a_edge=a[2 * embed_dim:, 0][None, :])

        def mha_params(ks):
            return dict(wq=xavier_uniform(ks[0], (embed_dim, embed_dim)),
                        wk=xavier_uniform(ks[1], (embed_dim, embed_dim)),
                        wv=xavier_uniform(ks[2], (embed_dim, embed_dim)),
                        wo=xavier_uniform(ks[3], (embed_dim, embed_dim)))

        self.gat1 = gat_params(keys[0], keys[1])        # provably dead w.r.t. output
        self.gat2 = gat_params(keys[2], keys[3])
        self.self_attn = mha_params(keys[4:8])          # provably dead w.r.t. output
        self.enc_dec_attn = mha_params(keys[8:12])      # only wv / wo are live

    def __call__(self, x, edge_index, edge_attr, enc_output, unk_feature, mask):
        assert bool(jnp.all(edge_index[:, 0] == -1)), \
            'No edge with -1 is specified for the root node.'
        _, ex_edge_index, ex_edge_attr, _, ex_edge_mask = expand_data(
            x, edge_index, edge_attr, unk_feature, mask)
        src_idx = ex_edge_index[..., 0].astype(jnp.int32)
        tgt_idx = ex_edge_index[..., 1].astype(jnp.int32)
        return gat_forward_fused(
            ex_edge_attr, ex_edge_mask.astype(jnp.float32), src_idx, tgt_idx,
            enc_output[:, 0, :], self.enc_dec_attn['wv'], self.enc_dec_attn['wo'],
            self.gat2)


# ----------------------------------------------------------------------------
# Pure-JAX, un-simplified GAT layer (eval mode) -- used only for a self-check of
# the kernel's algebraic simplification.  All contractions are multiply+reduce so
# the comparison is not polluted by matmul-precision differences.
# ----------------------------------------------------------------------------
def _gat_layer_reference(x_in, ex_edge_index, ex_edge_attr, ex_edge_mask, W, a):
    B, S, N, _ = x_in.shape
    D = W.shape[1]
    E = ex_edge_index.shape[2]
    h = jnp.sum(x_in[..., :, None] * W[None, None, None, :, :], axis=-2)     # [B,S,N,D]
    src_idx = ex_edge_index[..., 0]
    tgt_idx = ex_edge_index[..., 1]
    src_mask = src_idx >= 0
    tgt_mask = tgt_idx >= 0

    def gather(idx):
        idx_c = jnp.clip(idx, 0, N - 1)
        return jnp.take_along_axis(
            h, jnp.broadcast_to(idx_c[..., None], (B, S, E, D)), axis=2)     # [B,S,E,D]

    src = jnp.where(src_mask[..., None], gather(src_idx), 0.0)
    tgt = jnp.where(tgt_mask[..., None], gather(tgt_idx), 0.0)
    cat = jnp.concatenate([src, tgt, ex_edge_attr], axis=-1)                 # [B,S,E,2D+Ed]
    e = jnp.sum(cat * a[:, 0][None, None, None, :], axis=-1)                 # [B,S,E]
    e = jnp.where(e > 0.0, e, 0.2 * e)                                       # LeakyReLU
    e = jnp.where(ex_edge_mask, e, -jnp.inf)
    e = jnp.where(jnp.any(jnp.isfinite(e), axis=-1, keepdims=True), e, 0.0)
    alpha = jax.nn.softmax(e, axis=-1)
    v_src = jnp.where(ex_edge_mask, src_idx, 0)
    v_tgt = jnp.where(ex_edge_mask, tgt_idx, 0)
    x_src_w = gather(v_src) * alpha[..., None]
    x_tgt_w = gather(v_tgt) * alpha[..., None]
    oh_t = jax.nn.one_hot(v_tgt, N, dtype=jnp.float32)                       # [B,S,E,N]
    oh_s = jax.nn.one_hot(v_src, N, dtype=jnp.float32)
    agg = (jnp.sum(oh_t[..., None] * x_src_w[..., None, :], axis=2)
           + jnp.sum(oh_s[..., None] * x_tgt_w[..., None, :], axis=2))       # [B,S,N,D]
    return jnp.where(agg > 0.0, agg, jnp.exp(agg) - 1.0)                     # ELU


# ----------------------------------------------------------------------------
if __name__ == "__main__":
    B, S, F, E_dim = 2, 6, 8, 4   # batch, seq_len, node_dim/embed_dim, edge_dim
    key = jax.random.PRNGKey(0)
    k_x, k_attr, k_enc, k_unk, k_param = jax.random.split(key, 5)

    x = jax.random.normal(k_x, (B, S, F), jnp.float32)
    edge_index = jnp.array([[-1, 1, 2, 0, -1, 3],
                            [-1, 0, 1, 2, 3, -1]], dtype=jnp.int32)
    edge_attr = jax.random.normal(k_attr, (B, S, E_dim), jnp.float32)
    enc_output = jax.random.normal(k_enc, (B, 1, F), jnp.float32)
    unk_feature = jax.random.normal(k_unk, (F,), jnp.float32)
    mask = jnp.array([[True, True, True, True, False, False],
                      [True, True, True, False, False, False]])

    model = GATPallas(embed_dim=F, edge_dim=E_dim, n_heads=2, key=k_param)
    out = model(x, edge_index, edge_attr, enc_output, unk_feature, mask)
    out = jax.block_until_ready(out)
    assert out.shape == (B, S, S + 1, F), out.shape
    assert bool(jnp.all(jnp.isfinite(out)))

    # Self-check: an un-simplified GAT layer applied to the enc-dec constant must
    # match the fused kernel (gat1 / self-attention never reach the reference
    # output -- see kernel header -- so this validates the full live path).
    _, ex_ei, ex_ea, _, ex_em = expand_data(x, edge_index, edge_attr, unk_feature, mask)
    c = _small_matmul(_small_matmul(enc_output[:, 0, :], model.enc_dec_attn['wv']),
                      model.enc_dec_attn['wo'])                               # [B, F]
    x_cb = jnp.broadcast_to(c[:, None, None, :], (B, S, S + 1, F))
    a_full = jnp.concatenate([model.gat2['a_src'][0], model.gat2['a_tgt'][0],
                              model.gat2['a_edge'][0]])[:, None]
    ref = _gat_layer_reference(x_cb, ex_ei, ex_ea, ex_em, model.gat2['W'], a_full)
    assert bool(jnp.allclose(out, ref, atol=1e-4, rtol=1e-4)), \
        float(jnp.max(jnp.abs(out - ref)))

    print("KERNEL_OK")
</pallas_src>

<mosaic_0001>
module attributes {stable_mosaic.version = 11 : i64} {
  func.func @_gat_fused_kernel(%arg0: memref<2x6x6x4xf32, #tpu.memory_space<vmem>>, %arg1: memref<2x6x6xf32, #tpu.memory_space<vmem>>, %arg2: memref<2x6x6xi32, #tpu.memory_space<vmem>>, %arg3: memref<2x6x6xi32, #tpu.memory_space<vmem>>, %arg4: memref<2x8xf32, #tpu.memory_space<vmem>>, %arg5: memref<8x8xf32, #tpu.memory_space<vmem>>, %arg6: memref<8x8xf32, #tpu.memory_space<vmem>>, %arg7: memref<8x8xf32, #tpu.memory_space<vmem>>, %arg8: memref<1x8xf32, #tpu.memory_space<vmem>>, %arg9: memref<1x8xf32, #tpu.memory_space<vmem>>, %arg10: memref<1x4xf32, #tpu.memory_space<vmem>>, %arg11: memref<2x6x7x8xf32, #tpu.memory_space<vmem>>) attributes {dimension_semantics = [], scalar_prefetch = 0 : i64, scratch_operands = 0 : i64, tpu.core_type = #tpu.core_type<tc>} {
    %c0 = arith.constant 0 : index
    %c0_0 = arith.constant 0 : index
    %c0_1 = arith.constant 0 : index
    %0 = vector.load %arg1[%c0, %c0_0, %c0_1] : memref<2x6x6xf32, #tpu.memory_space<vmem>>, vector<2x6x6xf32>
    %c0_2 = arith.constant 0 : index
    %c0_3 = arith.constant 0 : index
    %c0_4 = arith.constant 0 : index
    %c0_5 = arith.constant 0 : index
    %1 = vector.load %arg0[%c0_2, %c0_3, %c0_4, %c0_5] : memref<2x6x6x4xf32, #tpu.memory_space<vmem>>, vector<2x6x6x4xf32>
    %c0_6 = arith.constant 0 : index
    %c0_7 = arith.constant 0 : index
    %c0_8 = arith.constant 0 : index
    %2 = vector.load %arg2[%c0_6, %c0_7, %c0_8] : memref<2x6x6xi32, #tpu.memory_space<vmem>>, vector<2x6x6xi32>
    %c0_9 = arith.constant 0 : index
    %c0_10 = arith.constant 0 : index
    %c0_11 = arith.constant 0 : index
    %3 = vector.load %arg3[%c0_9, %c0_10, %c0_11] : memref<2x6x6xi32, #tpu.memory_space<vmem>>, vector<2x6x6xi32>
    %c0_i32 = arith.constant 0 : i32
    %4 = vector.broadcast %c0_i32 : i32 to vector<2x6x6xi32>
    %5 = arith.cmpi sge, %2, %4 : vector<2x6x6xi32>
    %6 = arith.extui %5 : vector<2x6x6xi1> to vector<2x6x6xi32>
    %7 = arith.sitofp %6 : vector<2x6x6xi32> to vector<2x6x6xf32>
    %c0_i32_12 = arith.constant 0 : i32
    %8 = vector.broadcast %c0_i32_12 : i32 to vector<2x6x6xi32>
    %9 = arith.cmpi sge, %3, %8 : vector<2x6x6xi32>
    %10 = arith.extui %9 : vector<2x6x6xi1> to vector<2x6x6xi32>
    %11 = arith.sitofp %10 : vector<2x6x6xi32> to vector<2x6x6xf32>
    %c0_13 = arith.constant 0 : index
    %c0_14 = arith.constant 0 : index
    %12 = vector.load %arg4[%c0_13, %c0_14] : memref<2x8xf32, #tpu.memory_space<vmem>>, vector<2x8xf32>
    %c0_15 = arith.constant 0 : index
    %c0_16 = arith.constant 0 : index
    %13 = vector.load %arg5[%c0_15, %c0_16] : memref<8x8xf32, #tpu.memory_space<vmem>>, vector<8x8xf32>
    %14 = vector.shape_cast %12 : vector<2x8xf32> to vector<2x8x1xf32>
    %15 = vector.shape_cast %13 : vector<8x8xf32> to vector<1x8x8xf32>
    %16 = vector.broadcast %14 : vector<2x8x1xf32> to vector<2x8x8xf32>
    %17 = vector.broadcast %15 : vector<1x8x8xf32> to vector<2x8x8xf32>
    %18 = arith.mulf %16, %17 : vector<2x8x8xf32>
    %cst = arith.constant dense<0.000000e+00> : vector<2x8xf32>
    %19 = vector.multi_reduction <add>, %18, %cst [1] : vector<2x8x8xf32> to vector<2x8xf32>
    %c0_17 = arith.constant 0 : index
    %c0_18 = arith.constant 0 : index
    %20 = vector.load %arg6[%c0_17, %c0_18] : memref<8x8xf32, #tpu.memory_space<vmem>>, vector<8x8xf32>
    %21 = vector.shape_cast %19 : vector<2x8xf32> to vector<2x8x1xf32>
    %22 = vector.shape_cast %20 : vector<8x8xf32> to vector<1x8x8xf32>
    %23 = vector.broadcast %21 : vector<2x8x1xf32> to vector<2x8x8xf32>
    %24 = vector.broadcast %22 : vector<1x8x8xf32> to vector<2x8x8xf32>
    %25 = arith.mulf %23, %24 : vector<2x8x8xf32>
    %cst_19 = arith.constant dense<0.000000e+00> : vector<2x8xf32>
    %26 = vector.multi_reduction <add>, %25, %cst_19 [1] : vector<2x8x8xf32> to vector<2x8xf32>
    %c0_20 = arith.constant 0 : index
    %c0_21 = arith.constant 0 : index
    %27 = vector.load %arg7[%c0_20, %c0_21] : memref<8x8xf32, #tpu.memory_space<vmem>>, vector<8x8xf32>
    %28 = vector.shape_cast %26 : vector<2x8xf32> to vector<2x8x1xf32>
    %29 = vector.shape_cast %27 : vector<8x8xf32> to vector<1x8x8xf32>
    %30 = vector.broadcast %28 : vector<2x8x1xf32> to vector<2x8x8xf32>
    %31 = vector.broadcast %29 : vector<1x8x8xf32> to vector<2x8x8xf32>
    %32 = arith.mulf %30, %31 : vector<2x8x8xf32>
    %cst_22 = arith.constant dense<0.000000e+00> : vector<2x8xf32>
    %33 = vector.multi_reduction <add>, %32, %cst_22 [1] : vector<2x8x8xf32> to vector<2x8xf32>
    %34 = vector.shape_cast %33 : vector<2x8xf32> to vector<2x1x8xf32>
    %c0_23 = arith.constant 0 : index
    %c0_24 = arith.constant 0 : index
    %35 = vector.load %arg8[%c0_23, %c0_24] : memref<1x8xf32, #tpu.memory_space<vmem>>, vector<1x8xf32>
    %36 = vector.shape_cast %35 : vector<1x8xf32> to vector<1x1x8xf32>
    %37 = vector.broadcast %36 : vector<1x1x8xf32> to vector<2x1x8xf32>
    %38 = arith.mulf %34, %37 : vector<2x1x8xf32>
    %cst_25 = arith.constant dense<0.000000e+00> : vector<2x1xf32>
    %39 = vector.multi_reduction <add>, %38, %cst_25 [2] : vector<2x1x8xf32> to vector<2x1xf32>
    %40 = vector.shape_cast %39 : vector<2x1xf32> to vector<2x1x1xf32>
    %41 = vector.shape_cast %33 : vector<2x8xf32> to vector<2x1x8xf32>
    %c0_26 = arith.constant 0 : index
    %c0_27 = arith.constant 0 : index
    %42 = vector.load %arg9[%c0_26, %c0_27] : memref<1x8xf32, #tpu.memory_space<vmem>>, vector<1x8xf32>
    %43 = vector.shape_cast %42 : vector<1x8xf32> to vector<1x1x8xf32>
    %44 = vector.broadcast %43 : vector<1x1x8xf32> to vector<2x1x8xf32>
    %45 = arith.mulf %41, %44 : vector<2x1x8xf32>
    %cst_28 = arith.constant dense<0.000000e+00> : vector<2x1xf32>
    %46 = vector.multi_reduction <add>, %45, %cst_28 [2] : vector<2x1x8xf32> to vector<2x1xf32>
    %47 = vector.shape_cast %46 : vector<2x1xf32> to vector<2x1x1xf32>
    %c0_29 = arith.constant 0 : index
    %c0_30 = arith.constant 0 : index
    %48 = vector.load %arg10[%c0_29, %c0_30] : memref<1x4xf32, #tpu.memory_space<vmem>>, vector<1x4xf32>
    %49 = vector.shape_cast %48 : vector<1x4xf32> to vector<1x1x1x4xf32>
    %50 = vector.broadcast %49 : vector<1x1x1x4xf32> to vector<2x6x6x4xf32>
    %51 = arith.mulf %1, %50 : vector<2x6x6x4xf32>
    %cst_31 = arith.constant dense<0.000000e+00> : vector<2x6x6xf32>
    %52 = vector.multi_reduction <add>, %51, %cst_31 [3] : vector<2x6x6x4xf32> to vector<2x6x6xf32>
    %53 = vector.broadcast %40 : vector<2x1x1xf32> to vector<2x6x6xf32>
    %54 = arith.mulf %7, %53 : vector<2x6x6xf32>
    %55 = vector.broadcast %47 : vector<2x1x1xf32> to vector<2x6x6xf32>
    %56 = arith.mulf %11, %55 : vector<2x6x6xf32>
    %57 = arith.addf %54, %56 : vector<2x6x6xf32>
    %58 = arith.addf %57, %52 : vector<2x6x6xf32>
    %cst_32 = arith.constant 0.000000e+00 : f32
    %59 = vector.broadcast %cst_32 : f32 to vector<2x6x6xf32>
    %60 = arith.cmpf oge, %58, %59 : vector<2x6x6xf32>
    %cst_33 = arith.constant 2.000000e-01 : f32
    %61 = vector.broadcast %cst_33 : f32 to vector<2x6x6xf32>
    %62 = arith.mulf %61, %58 : vector<2x6x6xf32>
    %63 = arith.select %60, %58, %62 : vector<2x6x6xi1>, vector<2x6x6xf32>
    %cst_34 = arith.constant 0.000000e+00 : f32
    %64 = vector.broadcast %cst_34 : f32 to vector<2x6x6xf32>
    %65 = arith.cmpf ogt, %0, %64 : vector<2x6x6xf32>
    %cst_35 = arith.constant -1.000000e+30 : f32
    %66 = vector.broadcast %cst_35 : f32 to vector<2x6x6xf32>
    %67 = arith.select %65, %63, %66 : vector<2x6x6xi1>, vector<2x6x6xf32>
    %cst_36 = arith.constant dense<0xFF800000> : vector<2x6xf32>
    %68 = vector.multi_reduction <maximumf>, %0, %cst_36 [2] : vector<2x6x6xf32> to vector<2x6xf32>
    %69 = vector.shape_cast %68 : vector<2x6xf32> to vector<2x6x1xf32>
    %cst_37 = arith.constant 0.000000e+00 : f32
    %70 = vector.broadcast %cst_37 : f32 to vector<2x6x1xf32>
    %71 = arith.cmpf ogt, %69, %70 : vector<2x6x1xf32>
    %cst_38 = arith.constant 0.000000e+00 : f32
    %72 = vector.shape_cast %71 : vector<2x6x1xi1> to vector<2x6x1xi1>
    %73 = vector.broadcast %72 : vector<2x6x1xi1> to vector<2x6x6xi1>
    %74 = vector.broadcast %cst_38 : f32 to vector<2x6x6xf32>
    %75 = arith.select %73, %67, %74 : vector<2x6x6xi1>, vector<2x6x6xf32>
    %cst_39 = arith.constant dense<0xFF800000> : vector<2x6xf32>
    %76 = vector.multi_reduction <maximumf>, %75, %cst_39 [2] : vector<2x6x6xf32> to vector<2x6xf32>
    %77 = vector.shape_cast %76 : vector<2x6xf32> to vector<2x6x1xf32>
    %78 = vector.broadcast %77 : vector<2x6x1xf32> to vector<2x6x6xf32>
    %79 = arith.subf %75, %78 : vector<2x6x6xf32>
    %80 = math.exp %79 : vector<2x6x6xf32>
    %cst_40 = arith.constant dense<0.000000e+00> : vector<2x6xf32>
    %81 = vector.multi_reduction <add>, %80, %cst_40 [2] : vector<2x6x6xf32> to vector<2x6xf32>
    %82 = vector.shape_cast %81 : vector<2x6xf32> to vector<2x6x1xf32>
    %83 = vector.broadcast %82 : vector<2x6x1xf32> to vector<2x6x6xf32>
    %84 = arith.divf %80, %83 : vector<2x6x6xf32>
    %cst_41 = arith.constant 0.000000e+00 : f32
    %85 = vector.broadcast %cst_41 : f32 to vector<2x6x6xf32>
    %86 = arith.cmpf ogt, %0, %85 : vector<2x6x6xf32>
    %c0_i32_42 = arith.constant 0 : i32
    %87 = vector.broadcast %c0_i32_42 : i32 to vector<2x6x6xi32>
    %88 = arith.select %86, %2, %87 : vector<2x6x6xi1>, vector<2x6x6xi32>
    %cst_43 = arith.constant 0.000000e+00 : f32
    %89 = vector.broadcast %cst_43 : f32 to vector<2x6x6xf32>
    %90 = arith.cmpf ogt, %0, %89 : vector<2x6x6xf32>
    %c0_i32_44 = arith.constant 0 : i32
    %91 = vector.broadcast %c0_i32_44 : i32 to vector<2x6x6xi32>
    %92 = arith.select %90, %3, %91 : vector<2x6x6xi1>, vector<2x6x6xi32>
    %93 = tpu.iota {dimensions = array<i32: 3>} : vector<2x6x6x7xi32>
    %94 = vector.shape_cast %88 : vector<2x6x6xi32> to vector<2x6x6x1xi32>
    %95 = vector.broadcast %94 : vector<2x6x6x1xi32> to vector<2x6x6x7xi32>
    %96 = arith.cmpi eq, %95, %93 : vector<2x6x6x7xi32>
    %97 = arith.extui %96 : vector<2x6x6x7xi1> to vector<2x6x6x7xi32>
    %98 = arith.sitofp %97 : vector<2x6x6x7xi32> to vector<2x6x6x7xf32>
    %99 = vector.shape_cast %92 : vector<2x6x6xi32> to vector<2x6x6x1xi32>
    %100 = vector.broadcast %99 : vector<2x6x6x1xi32> to vector<2x6x6x7xi32>
    %101 = arith.cmpi eq, %100, %93 : vector<2x6x6x7xi32>
    %102 = arith.extui %101 : vector<2x6x6x7xi1> to vector<2x6x6x7xi32>
    %103 = arith.sitofp %102 : vector<2x6x6x7xi32> to vector<2x6x6x7xf32>
    %104 = arith.addf %98, %103 : vector<2x6x6x7xf32>
    %105 = vector.shape_cast %84 : vector<2x6x6xf32> to vector<2x6x6x1xf32>
    %106 = vector.broadcast %105 : vector<2x6x6x1xf32> to vector<2x6x6x7xf32>
    %107 = arith.mulf %106, %104 : vector<2x6x6x7xf32>
    %cst_45 = arith.constant dense<0.000000e+00> : vector<2x6x7xf32>
    %108 = vector.multi_reduction <add>, %107, %cst_45 [2] : vector<2x6x6x7xf32> to vector<2x6x7xf32>
    %109 = vector.shape_cast %108 : vector<2x6x7xf32> to vector<2x6x7x1xf32>
    %110 = vector.shape_cast %33 : vector<2x8xf32> to vector<2x1x1x8xf32>
    %111 = vector.broadcast %109 : vector<2x6x7x1xf32> to vector<2x6x7x8xf32>
    %112 = vector.broadcast %110 : vector<2x1x1x8xf32> to vector<2x6x7x8xf32>
    %113 = arith.mulf %111, %112 : vector<2x6x7x8xf32>
    %cst_46 = arith.constant 0.000000e+00 : f32
    %114 = vector.broadcast %cst_46 : f32 to vector<2x6x7x8xf32>
    %115 = arith.cmpf ogt, %113, %114 : vector<2x6x7x8xf32>
    %116 = math.exp %113 : vector<2x6x7x8xf32>
    %cst_47 = arith.constant 1.000000e+00 : f32
    %117 = vector.broadcast %cst_47 : f32 to vector<2x6x7x8xf32>
    %118 = arith.subf %116, %117 : vector<2x6x7x8xf32>
    %119 = arith.select %115, %113, %118 : vector<2x6x7x8xi1>, vector<2x6x7x8xf32>
    %c0_48 = arith.constant 0 : index
    %c0_49 = arith.constant 0 : index
    %c0_50 = arith.constant 0 : index
    %c0_51 = arith.constant 0 : index
    %120 = vector.load %arg11[%c0_48, %c0_49, %c0_50, %c0_51] : memref<2x6x7x8xf32, #tpu.memory_space<vmem>>, vector<2x6x7x8xf32>
    tpu.vector_store %arg11[%c0_48, %c0_49, %c0_50, %c0_51], %119 {strides = array<i32>} : memref<2x6x7x8xf32, #tpu.memory_space<vmem>>, vector<2x6x7x8xf32>,
    return
  }
}

</mosaic_0001>

<llo_original>
// kernel: tpu_custom_call.1
$region0: #{tpu_custom_call.1}
  #allocation0 [shape = 'u32[]', space=smem, size = 0x4, offset = 0x4, fixed_abs, tag = 'smem constant byte address 0x4 - core index']
  #allocation1 [shape = 'u32[72,128]{1,0:T(1,128)}', space=vmem, size = 0x9000, scoped, tag = 'internal scratch']
  %s0 = inlined_call_operand.vmem [shape: f32[2,6,6,4], index: 0, kind: input, shape index: {}]
  %s1 = inlined_call_operand.vmem [shape: f32[2,6,6], index: 1, kind: input, shape index: {}]
  %s2 = inlined_call_operand.vmem [shape: s32[2,6,6], index: 2, kind: input, shape index: {}]
  %s3 = inlined_call_operand.vmem [shape: s32[2,6,6], index: 3, kind: input, shape index: {}]
  %s4 = inlined_call_operand.vmem [shape: f32[2,8], index: 4, kind: input, shape index: {}]
  %s5 = inlined_call_operand.vmem [shape: f32[8,8], index: 5, kind: input, shape index: {}]
  %s6 = inlined_call_operand.vmem [shape: f32[8,8], index: 6, kind: input, shape index: {}]
  %s7 = inlined_call_operand.vmem [shape: f32[8,8], index: 7, kind: input, shape index: {}]
  %s8 = inlined_call_operand.vmem [shape: f32[1,8], index: 8, kind: input, shape index: {}]
  %s9 = inlined_call_operand.vmem [shape: f32[1,8], index: 9, kind: input, shape index: {}]
  %s10 = inlined_call_operand.vmem [shape: f32[1,4], index: 10, kind: input, shape index: {}]
  %s11 = inlined_call_operand.vmem [shape: f32[2,6,7,8], index: 11, kind: output, shape index: {}]
  %s12 = sld [smem:[#allocation0]]
  $region54: #{tpu_custom_call.1} parent=0
    _
  %s14 = ssub.s32 1, %s12
  %s15 = scalar_select 0, %s14, %s12
  // Predicated region
  $region2: #{tpu_custom_call.1} parent=0 // pred_check
    _
  $region3: #{tpu_custom_call.1} parent=0 // pred_check_branch
    %17 = sbr.rel (0) target = $region5
  $region4: #{tpu_custom_call.1} parent=0 // pred_region
    _
  $region5: #{tpu_custom_call.1} parent=0 // pred_fallthru
    _
  // Predicated region
  $region6: #{tpu_custom_call.1} parent=0 // pred_check
    _
  $region7: #{tpu_custom_call.1} parent=0 // pred_check_branch
    %19 = sbr.rel (0) target = $region9
  $region8: #{tpu_custom_call.1} parent=0 // pred_region
    _
  $region9: #{tpu_custom_call.1} parent=0 // pred_fallthru
    _
  // Predicated region
  $region10: #{tpu_custom_call.1} parent=0 // pred_check
    _
  $region11: #{tpu_custom_call.1} parent=0 // pred_check_branch
    %21 = sbr.rel (0) target = $region13
  $region12: #{tpu_custom_call.1} parent=0 // pred_region
    _
  $region13: #{tpu_custom_call.1} parent=0 // pred_fallthru
    _
  // Predicated region
  $region14: #{tpu_custom_call.1} parent=0 // pred_check
    _
  $region15: #{tpu_custom_call.1} parent=0 // pred_check_branch
    %23 = sbr.rel (0) target = $region17
  $region16: #{tpu_custom_call.1} parent=0 // pred_region
    _
  $region17: #{tpu_custom_call.1} parent=0 // pred_fallthru
    _
  // Predicated region
  $region18: #{tpu_custom_call.1} parent=0 // pred_check
    _
  $region19: #{tpu_custom_call.1} parent=0 // pred_check_branch
    %25 = sbr.rel (0) target = $region21
  $region20: #{tpu_custom_call.1} parent=0 // pred_region
    _
  $region21: #{tpu_custom_call.1} parent=0 // pred_fallthru
    _
  // Predicated region
  $region22: #{tpu_custom_call.1} parent=0 // pred_check
    _
  $region23: #{tpu_custom_call.1} parent=0 // pred_check_branch
    %27 = sbr.rel (0) target = $region25
  $region24: #{tpu_custom_call.1} parent=0 // pred_region
    _
  $region25: #{tpu_custom_call.1} parent=0 // pred_fallthru
    _
  // Predicated region
  $region26: #{tpu_custom_call.1} parent=0 // pred_check
    _
  $region27: #{tpu_custom_call.1} parent=0 // pred_check_branch
    %29 = sbr.rel (0) target = $region29
  $region28: #{tpu_custom_call.1} parent=0 // pred_region
    _
  $region29: #{tpu_custom_call.1} parent=0 // pred_fallthru
    _
  // Predicated region
  $region30: #{tpu_custom_call.1} parent=0 // pred_check
    _
  $region31: #{tpu_custom_call.1} parent=0 // pred_check_branch
    %31 = sbr.rel (0) target = $region33
  $region32: #{tpu_custom_call.1} parent=0 // pred_region
    _
  $region33: #{tpu_custom_call.1} parent=0 // pred_fallthru
    _
  // Predicated region
  $region34: #{tpu_custom_call.1} parent=0 // pred_check
    _
  $region35: #{tpu_custom_call.1} parent=0 // pred_check_branch
    %33 = sbr.rel (0) target = $region37
  $region36: #{tpu_custom_call.1} parent=0 // pred_region
    _
  $region37: #{tpu_custom_call.1} parent=0 // pred_fallthru
    _
  // Predicated region
  $region38: #{tpu_custom_call.1} parent=0 // pred_check
    _
  $region39: #{tpu_custom_call.1} parent=0 // pred_check_branch
    %35 = sbr.rel (0) target = $region41
  $region40: #{tpu_custom_call.1} parent=0 // pred_region
    _
  $region41: #{tpu_custom_call.1} parent=0 // pred_fallthru
    _
  // Predicated region
  $region42: #{tpu_custom_call.1} parent=0 // pred_check
    _
  $region43: #{tpu_custom_call.1} parent=0 // pred_check_branch
    %37 = sbr.rel (0) target = $region45
  $region44: #{tpu_custom_call.1} parent=0 // pred_region
    _
  $region45: #{tpu_custom_call.1} parent=0 // pred_fallthru
    _
  %v38 = vld [vmem:[%s1] sm:$0x3f]
  %v39 = vld [vmem:[%s1 + $0x8] sm:$0x3f]
  %v40 = vld [vmem:[%s0] sm:$0x3f]
  %v41 = vld [vmem:[%s0 + $0x8] sm:$0x3f]
  %v42 = vld [vmem:[%s0 + $0x10] sm:$0x3f]
  %v43 = vld [vmem:[%s0 + $0x18] sm:$0x3f]
  %v44 = vld [vmem:[%s0 + $0x20] sm:$0x3f]
  %v45 = vld [vmem:[%s0 + $0x28] sm:$0x3f]
  %v46 = vld [vmem:[%s0 + $0x30] sm:$0x3f]
  %v47 = vld [vmem:[%s0 + $0x38] sm:$0x3f]
  %v48 = vld [vmem:[%s0 + $0x40] sm:$0x3f]
  %v49 = vld [vmem:[%s0 + $0x48] sm:$0x3f]
  %v50 = vld [vmem:[%s0 + $0x50] sm:$0x3f]
  %v51 = vld [vmem:[%s0 + $0x58] sm:$0x3f]
  %v52 = vld [vmem:[%s2] sm:$0x3f]
  %v53 = vld [vmem:[%s2 + $0x8] sm:$0x3f]
  %v54 = vld [vmem:[%s3] sm:$0x3f]
  %v55 = vld [vmem:[%s3 + $0x8] sm:$0x3f]
  %vm56 = vcmp.ge.s32.totalorder %v52, 0
  %vm57 = vcmp.ge.s32.totalorder %v53, 0
  %v58 = vsel %vm56, 1, 0
  %v59 = vsel %vm57, 1, 0
  %v60 = vcvt.s32.f32 %v58
  %v61 = vcvt.s32.f32 %v59
  %vm62 = vcmp.ge.s32.totalorder %v54, 0
  %vm63 = vcmp.ge.s32.totalorder %v55, 0
  %v64 = vsel %vm62, 1, 0
  %v65 = vsel %vm63, 1, 0
  %v66 = vcvt.s32.f32 %v64
  %v67 = vcvt.s32.f32 %v65
  %v68 = vld [vmem:[%s4] sm:$0x3]
  %v69 = vld [vmem:[%s5] sm:$0xff]
  %v70 = vperm.slane %v68, 0
  %v71 = vlaneseq
  %v72 = vshrl.u32 %v71, 7
  %74 = vset.pattern.permute.xlu0 %v72
  %75 = vperm.xlu0 %74, %v70
  %v76 = vpop.permute.xlu0 %75
  %v77 = vperm.slane %v68, 1
  %v78 = vlaneseq
  %v79 = vshrl.u32 %v78, 7
  %81 = vset.pattern.permute.xlu0 %v79
  %82 = vperm.xlu0 %81, %v77
  %v83 = vpop.permute.xlu0 %82
  %v84 = vmul.f32 %v76, %v69
  %v85 = vmul.f32 %v83, %v69
  %vm86 = vcmask 64512
  %v87 = vsel %vm86, %v84, 0.0
  %v88 = vrot.slane %v87, 4
  %v89 = vadd.f32 %v87, %v88
  %v90 = vrot.slane %v89, 2
  %v91 = vadd.f32 %v89, %v90
  %v92 = vrot.slane %v91, 1
  %v93 = vadd.f32 %v91, %v92
  %v94 = vsel %vm86, %v85, 0.0
  %v95 = vrot.slane %v94, 4
  %v96 = vadd.f32 %v94, %v95
  %v97 = vrot.slane %v96, 2
  %v98 = vadd.f32 %v96, %v97
  %v99 = vrot.slane %v98, 1
  %v100 = vadd.f32 %v98, %v99
  %v101 = vld [vmem:[%s6] sm:$0xff]
  %v102 = vlaneseq
  %v103 = vshrl.u32 %v102, 7
  %105 = vset.pattern.permute.xlu0 %v103
  %106 = vperm.xlu0 %105, %v93
  %v107 = vpop.permute.xlu0 %106
  %v108 = vlaneseq
  %v109 = vshrl.u32 %v108, 7
  %111 = vset.pattern.permute.xlu0 %v109
  %112 = vperm.xlu0 %111, %v100
  %v113 = vpop.permute.xlu0 %112
  %v114 = vmul.f32 %v107, %v101
  %v115 = vmul.f32 %v113, %v101
  %v116 = vsel %vm86, %v114, 0.0
  %v117 = vrot.slane %v116, 4
  %v118 = vadd.f32 %v116, %v117
  %v119 = vrot.slane %v118, 2
  %v120 = vadd.f32 %v118, %v119
  %v121 = vrot.slane %v120, 1
  %v122 = vadd.f32 %v120, %v121
  %v123 = vsel %vm86, %v115, 0.0
  %v124 = vrot.slane %v123, 4
  %v125 = vadd.f32 %v123, %v124
  %v126 = vrot.slane %v125, 2
  %v127 = vadd.f32 %v125, %v126
  %v128 = vrot.slane %v127, 1
  %v129 = vadd.f32 %v127, %v128
  %v130 = vld [vmem:[%s7] sm:$0xff]
  %v131 = vlaneseq
  %v132 = vshrl.u32 %v131, 7
  %134 = vset.pattern.permute.xlu0 %v132
  %135 = vperm.xlu0 %134, %v122
  %v136 = vpop.permute.xlu0 %135
  %v137 = vlaneseq
  %v138 = vshrl.u32 %v137, 7
  %140 = vset.pattern.permute.xlu0 %v138
  %141 = vperm.xlu0 %140, %v129
  %v142 = vpop.permute.xlu0 %141
  %v143 = vmul.f32 %v136, %v130
  %v144 = vmul.f32 %v142, %v130
  %v145 = vsel %vm86, %v143, 0.0
  %v146 = vrot.slane %v145, 4
  %v147 = vadd.f32 %v145, %v146
  %v148 = vrot.slane %v147, 2
  %v149 = vadd.f32 %v147, %v148
  %v150 = vrot.slane %v149, 1
  %v151 = vadd.f32 %v149, %v150
  %v152 = vsel %vm86, %v144, 0.0
  %v153 = vrot.slane %v152, 4
  %v154 = vadd.f32 %v152, %v153
  %v155 = vrot.slane %v154, 2
  %v156 = vadd.f32 %v154, %v155
  %v157 = vrot.slane %v156, 1
  %v158 = vadd.f32 %v156, %v157
  %v159 = vld [vmem:[%s8] sm:$0x1]
  %v160 = vmul.f32 %v151, %v159
  %v161 = vmul.f32 %v158, %v159
  %vm162 = vcmask 57344
  %v163 = vsel %vm162, %v160, 0.0
  %164 = vadd.xlane.f32.xlu0 %v163
  %v165 = vpop.xlane.xlu0 %164
  %v166 = vsel %vm162, %v161, 0.0
  %167 = vadd.xlane.f32.xlu0 %v166
  %v168 = vpop.xlane.xlu0 %167
  %v169 = vld [vmem:[%s9] sm:$0x1]
  %v170 = vmul.f32 %v151, %v169
  %v171 = vmul.f32 %v158, %v169
  %v172 = vsel %vm162, %v170, 0.0
  %173 = vadd.xlane.f32.xlu0 %v172
  %v174 = vpop.xlane.xlu0 %173
  %v175 = vsel %vm162, %v171, 0.0
  %176 = vadd.xlane.f32.xlu0 %v175
  %v177 = vpop.xlane.xlu0 %176
  %v178 = vld [vmem:[%s10] sm:$0x1]
  %v180 = vperm.slane %v178, 0
  %v182 = vmul.f32 %v40, %v180
  %v183 = vmul.f32 %v41, %v180
  %v184 = vmul.f32 %v42, %v180
  %v185 = vmul.f32 %v43, %v180
  %v186 = vmul.f32 %v44, %v180
  %v187 = vmul.f32 %v45, %v180
  %v188 = vmul.f32 %v46, %v180
  %v189 = vmul.f32 %v47, %v180
  %v190 = vmul.f32 %v48, %v180
  %v191 = vmul.f32 %v49, %v180
  %v192 = vmul.f32 %v50, %v180
  %v193 = vmul.f32 %v51, %v180
  %vm194 = vcmask 29696
  %v195 = vsel %vm194, %v182, 0.0
  %196 = vadd.xlane.f32.xlu0 %v195
  %v197 = vpop.xlane.xlu0 %196
  %v198 = vsel %vm194, %v183, 0.0
  %199 = vadd.xlane.f32.xlu0 %v198
  %v200 = vpop.xlane.xlu0 %199
  %v201 = vsel %vm194, %v184, 0.0
  %202 = vadd.xlane.f32.xlu0 %v201
  %v203 = vpop.xlane.xlu0 %202
  %v204 = vsel %vm194, %v185, 0.0
  %205 = vadd.xlane.f32.xlu0 %v204
  %v206 = vpop.xlane.xlu0 %205
  %v207 = vsel %vm194, %v186, 0.0
  %208 = vadd.xlane.f32.xlu0 %v207
  %v209 = vpop.xlane.xlu0 %208
  %v210 = vsel %vm194, %v187, 0.0
  %211 = vadd.xlane.f32.xlu0 %v210
  %v212 = vpop.xlane.xlu0 %211
  %v213 = vsel %vm194, %v188, 0.0
  %214 = vadd.xlane.f32.xlu0 %v213
  %v215 = vpop.xlane.xlu0 %214
  %v216 = vsel %vm194, %v189, 0.0
  %217 = vadd.xlane.f32.xlu0 %v216
  %v218 = vpop.xlane.xlu0 %217
  %v219 = vsel %vm194, %v190, 0.0
  %220 = vadd.xlane.f32.xlu0 %v219
  %v221 = vpop.xlane.xlu0 %220
  %v222 = vsel %vm194, %v191, 0.0
  %223 = vadd.xlane.f32.xlu0 %v222
  %v224 = vpop.xlane.xlu0 %223
  %v225 = vsel %vm194, %v192, 0.0
  %226 = vadd.xlane.f32.xlu0 %v225
  %v227 = vpop.xlane.xlu0 %226
  %v228 = vsel %vm194, %v193, 0.0
  %229 = vadd.xlane.f32.xlu0 %v228
  %v230 = vpop.xlane.xlu0 %229
  %v231 = vperm.slane %v165, 0
  %v232 = vperm.slane %v168, 0
  %v233 = vmul.f32 %v60, %v231
  %v234 = vmul.f32 %v61, %v232
  %v235 = vperm.slane %v174, 0
  %v236 = vperm.slane %v177, 0
  %v237 = vmul.f32 %v66, %v235
  %v238 = vmul.f32 %v67, %v236
  %v239 = vadd.f32 %v233, %v237
  %v240 = vadd.f32 %v234, %v238
  %v253 = vlaneseq
  %v254 = vand.u32 %v253, 127
  %v255 = vperm.slane %v197, %v254
  %v256 = vperm.slane %v200, %v254
  %v257 = vperm.slane %v203, %v254
  %v258 = vperm.slane %v206, %v254
  %v259 = vperm.slane %v209, %v254
  %v260 = vperm.slane %v212, %v254
  %v261 = vperm.slane %v215, %v254
  %v262 = vperm.slane %v218, %v254
  %v263 = vperm.slane %v221, %v254
  %v264 = vperm.slane %v224, %v254
  %v265 = vperm.slane %v227, %v254
  %v266 = vperm.slane %v230, %v254
  %vm267 = vcmask 1041409
  %v268 = vsel %vm267, %v256, %v255
  %vm269 = vcmask 1042434
  %v270 = vsel %vm269, %v257, %v268
  %vm271 = vcmask 1043459
  %v272 = vsel %vm271, %v258, %v270
  %vm273 = vcmask 1044484
  %v274 = vsel %vm273, %v259, %v272
  %vm275 = vcmask 1045509
  %v276 = vsel %vm275, %v260, %v274
  %v277 = vsel %vm267, %v262, %v261
  %v278 = vsel %vm269, %v263, %v277
  %v279 = vsel %vm271, %v264, %v278
  %v280 = vsel %vm273, %v265, %v279
  %v281 = vsel %vm275, %v266, %v280
  %v284 = vadd.f32 %v239, %v276
  %v285 = vadd.f32 %v240, %v281
  %vm286 = vcmp.ge.f32.partialorder %v284, 0.0
  %vm287 = vcmp.ge.f32.partialorder %v285, 0.0
  %v288 = vmul.f32 %v284, 0.2
  %v289 = vmul.f32 %v285, 0.2
  %v290 = vsel %vm286, %v284, %v288
  %v291 = vsel %vm287, %v285, %v289
  %vm292 = vcmp.gt.f32.partialorder %v38, 0.0
  %vm293 = vcmp.gt.f32.partialorder %v39, 0.0
  %v294 = vsel %vm292, %v290, -1e+30
  %v295 = vsel %vm293, %v291, -1e+30
  %vm296 = vcmask 46080
  %v297 = vsel %vm296, %v38, -inf
  %298 = vmax.xlane.f32.xlu0 %v297
  %v299 = vpop.xlane.xlu0 %298
  %v300 = vsel %vm296, %v39, -inf
  %301 = vmax.xlane.f32.xlu0 %v300
  %v302 = vpop.xlane.xlu0 %301
  %vm303 = vcmp.gt.f32.partialorder %v299, 0.0
  %vm304 = vcmp.gt.f32.partialorder %v302, 0.0
  %v305 = vsel %vm303, 1, 0
  %v306 = vsel %vm304, 1, 0
  %vm307 = vcmp.eq.s32.totalorder %v305, 1
  %vm308 = vcmp.eq.s32.totalorder %v306, 1
  %v309 = vsel %vm307, %v294, 0.0
  %v310 = vsel %vm308, %v295, 0.0
  %v311 = vsel %vm296, %v309, -inf
  %312 = vmax.xlane.f32.xlu0 %v311
  %v313 = vpop.xlane.xlu0 %312
  %v314 = vsel %vm296, %v310, -inf
  %315 = vmax.xlane.f32.xlu0 %v314
  %v316 = vpop.xlane.xlu0 %315
  %v317 = vsub.f32 %v309, %v313
  %v318 = vsub.f32 %v310, %v316
  %v319 = vmul.f32 %v317, 1.442695
  %v320 = vpow.pop %v319
  %v321 = vmul.f32 %v318, 1.442695
  %v322 = vpow.pop %v321
  %v323 = vsel %vm296, %v320, 0.0
  %324 = vadd.xlane.f32.xlu0 %v323
  %v325 = vpop.xlane.xlu0 %324
  %v326 = vsel %vm296, %v322, 0.0
  %327 = vadd.xlane.f32.xlu0 %v326
  %v328 = vpop.xlane.xlu0 %327
  %v329 = vrcp.pop %v325
  %v330 = vmul.f32 %v325, %v329
  %v331 = vsub.f32 1.0, %v330
  %v332 = vmul.f32 %v329, %v331
  %v333 = vadd.f32 %v329, %v332
  %vm334 = vweird.f32 %v325
  %vm335 = vweird.f32 %v329
  %vm336 = vmor %vm334, %vm335
  %v337 = vsel %vm336, %v329, %v333
  %v338 = vand.u32 2147483647, %v325
  %vm339 = vcmp.eq.f32.partialorder %v338, 8.507059e+37
  %v340 = vand.u32 %v325, 2147483648
  %v341 = vor.u32 1.1754944e-38, %v340
  %v342 = vsel %vm339, %v341, %v337
  %v343 = vmul.f32 %v320, %v342
  %v344 = vrcp.pop %v328
  %v345 = vmul.f32 %v328, %v344
  %v346 = vsub.f32 1.0, %v345
  %v347 = vmul.f32 %v344, %v346
  %v348 = vadd.f32 %v344, %v347
  %vm349 = vweird.f32 %v328
  %vm350 = vweird.f32 %v344
  %vm351 = vmor %vm349, %vm350
  %v352 = vsel %vm351, %v344, %v348
  %v353 = vand.u32 2147483647, %v328
  %vm354 = vcmp.eq.f32.partialorder %v353, 8.507059e+37
  %v355 = vand.u32 %v328, 2147483648
  %v356 = vor.u32 1.1754944e-38, %v355
  %v357 = vsel %vm354, %v356, %v352
  %v358 = vmul.f32 %v322, %v357
  %v359 = vsel %vm292, %v52, 0
  %v360 = vsel %vm293, %v53, 0
  %v361 = vsel %vm292, %v54, 0
  %v362 = vsel %vm293, %v55, 0
  %v363 = vperm.slane %v359, 0
  %v364 = vlaneseq
  %v365 = vshrl.u32 %v364, 7
  %367 = vset.pattern.permute.xlu0 %v365
  %368 = vperm.xlu0 %367, %v363
  %v369 = vpop.permute.xlu0 %368
  %v370 = vperm.slane %v359, 1
  %v371 = vlaneseq
  %v372 = vshrl.u32 %v371, 7
  %374 = vset.pattern.permute.xlu0 %v372
  %375 = vperm.xlu0 %374, %v370
  %v376 = vpop.permute.xlu0 %375
  %v377 = vperm.slane %v359, 2
  %v378 = vlaneseq
  %v379 = vshrl.u32 %v378, 7
  %381 = vset.pattern.permute.xlu0 %v379
  %382 = vperm.xlu0 %381, %v377
  %v383 = vpop.permute.xlu0 %382
  %v384 = vperm.slane %v359, 3
  %v385 = vlaneseq
  %v386 = vshrl.u32 %v385, 7
  %388 = vset.pattern.permute.xlu0 %v386
  %389 = vperm.xlu0 %388, %v384
  %v390 = vpop.permute.xlu0 %389
  %v391 = vperm.slane %v359, 4
  %v392 = vlaneseq
  %v393 = vshrl.u32 %v392, 7
  %395 = vset.pattern.permute.xlu0 %v393
  %396 = vperm.xlu0 %395, %v391
  %v397 = vpop.permute.xlu0 %396
  %v398 = vperm.slane %v359, 5
  %v399 = vlaneseq
  %v400 = vshrl.u32 %v399, 7
  %402 = vset.pattern.permute.xlu0 %v400
  %403 = vperm.xlu0 %402, %v398
  %v404 = vpop.permute.xlu0 %403
  %v405 = vperm.slane %v360, 0
  %v406 = vlaneseq
  %v407 = vshrl.u32 %v406, 7
  %409 = vset.pattern.permute.xlu0 %v407
  %410 = vperm.xlu0 %409, %v405
  %v411 = vpop.permute.xlu0 %410
  %v412 = vperm.slane %v360, 1
  %v413 = vlaneseq
  %v414 = vshrl.u32 %v413, 7
  %416 = vset.pattern.permute.xlu0 %v414
  %417 = vperm.xlu0 %416, %v412
  %v418 = vpop.permute.xlu0 %417
  %v419 = vperm.slane %v360, 2
  %v420 = vlaneseq
  %v421 = vshrl.u32 %v420, 7
  %423 = vset.pattern.permute.xlu0 %v421
  %424 = vperm.xlu0 %423, %v419
  %v425 = vpop.permute.xlu0 %424
  %v426 = vperm.slane %v360, 3
  %v427 = vlaneseq
  %v428 = vshrl.u32 %v427, 7
  %430 = vset.pattern.permute.xlu0 %v428
  %431 = vperm.xlu0 %430, %v426
  %v432 = vpop.permute.xlu0 %431
  %v433 = vperm.slane %v360, 4
  %v434 = vlaneseq
  %v435 = vshrl.u32 %v434, 7
  %437 = vset.pattern.permute.xlu0 %v435
  %438 = vperm.xlu0 %437, %v433
  %v439 = vpop.permute.xlu0 %438
  %v440 = vperm.slane %v360, 5
  %v441 = vlaneseq
  %v442 = vshrl.u32 %v441, 7
  %444 = vset.pattern.permute.xlu0 %v442
  %445 = vperm.xlu0 %444, %v440
  %v446 = vpop.permute.xlu0 %445
  %vm447 = vcmp.eq.s32.totalorder %v369, %v254
  %vm448 = vcmp.eq.s32.totalorder %v376, %v254
  %vm449 = vcmp.eq.s32.totalorder %v383, %v254
  %vm450 = vcmp.eq.s32.totalorder %v390, %v254
  %vm451 = vcmp.eq.s32.totalorder %v397, %v254
  %vm452 = vcmp.eq.s32.totalorder %v404, %v254
  %vm453 = vcmp.eq.s32.totalorder %v411, %v254
  %vm454 = vcmp.eq.s32.totalorder %v418, %v254
  %vm455 = vcmp.eq.s32.totalorder %v425, %v254
  %vm456 = vcmp.eq.s32.totalorder %v432, %v254
  %vm457 = vcmp.eq.s32.totalorder %v439, %v254
  %vm458 = vcmp.eq.s32.totalorder %v446, %v254
  %v459 = vsel %vm447, 1, 0
  %v460 = vsel %vm448, 1, 0
  %v461 = vsel %vm449, 1, 0
  %v462 = vsel %vm450, 1, 0
  %v463 = vsel %vm451, 1, 0
  %v464 = vsel %vm452, 1, 0
  %v465 = vsel %vm453, 1, 0
  %v466 = vsel %vm454, 1, 0
  %v467 = vsel %vm455, 1, 0
  %v468 = vsel %vm456, 1, 0
  %v469 = vsel %vm457, 1, 0
  %v470 = vsel %vm458, 1, 0
  %v471 = vcvt.s32.f32 %v459
  %v472 = vcvt.s32.f32 %v460
  %v473 = vcvt.s32.f32 %v461
  %v474 = vcvt.s32.f32 %v462
  %v475 = vcvt.s32.f32 %v463
  %v476 = vcvt.s32.f32 %v464
  %v477 = vcvt.s32.f32 %v465
  %v478 = vcvt.s32.f32 %v466
  %v479 = vcvt.s32.f32 %v467
  %v480 = vcvt.s32.f32 %v468
  %v481 = vcvt.s32.f32 %v469
  %v482 = vcvt.s32.f32 %v470
  %v483 = vperm.slane %v361, 0
  %v484 = vlaneseq
  %v485 = vshrl.u32 %v484, 7
  %487 = vset.pattern.permute.xlu0 %v485
  %488 = vperm.xlu0 %487, %v483
  %v489 = vpop.permute.xlu0 %488
  %v490 = vperm.slane %v361, 1
  %v491 = vlaneseq
  %v492 = vshrl.u32 %v491, 7
  %494 = vset.pattern.permute.xlu0 %v492
  %495 = vperm.xlu0 %494, %v490
  %v496 = vpop.permute.xlu0 %495
  %v497 = vperm.slane %v361, 2
  %v498 = vlaneseq
  %v499 = vshrl.u32 %v498, 7
  %501 = vset.pattern.permute.xlu0 %v499
  %502 = vperm.xlu0 %501, %v497
  %v503 = vpop.permute.xlu0 %502
  %v504 = vperm.slane %v361, 3
  %v505 = vlaneseq
  %v506 = vshrl.u32 %v505, 7
  %508 = vset.pattern.permute.xlu0 %v506
  %509 = vperm.xlu0 %508, %v504
  %v510 = vpop.permute.xlu0 %509
  %v511 = vperm.slane %v361, 4
  %v512 = vlaneseq
  %v513 = vshrl.u32 %v512, 7
  %515 = vset.pattern.permute.xlu0 %v513
  %516 = vperm.xlu0 %515, %v511
  %v517 = vpop.permute.xlu0 %516
  %v518 = vperm.slane %v361, 5
  %v519 = vlaneseq
  %v520 = vshrl.u32 %v519, 7
  %522 = vset.pattern.permute.xlu0 %v520
  %523 = vperm.xlu0 %522, %v518
  %v524 = vpop.permute.xlu0 %523
  %v525 = vperm.slane %v362, 0
  %v526 = vlaneseq
  %v527 = vshrl.u32 %v526, 7
  %529 = vset.pattern.permute.xlu0 %v527
  %530 = vperm.xlu0 %529, %v525
  %v531 = vpop.permute.xlu0 %530
  %v532 = vperm.slane %v362, 1
  %v533 = vlaneseq
  %v534 = vshrl.u32 %v533, 7
  %536 = vset.pattern.permute.xlu0 %v534
  %537 = vperm.xlu0 %536, %v532
  %v538 = vpop.permute.xlu0 %537
  %v539 = vperm.slane %v362, 2
  %v540 = vlaneseq
  %v541 = vshrl.u32 %v540, 7
  %543 = vset.pattern.permute.xlu0 %v541
  %544 = vperm.xlu0 %543, %v539
  %v545 = vpop.permute.xlu0 %544
  %v546 = vperm.slane %v362, 3
  %v547 = vlaneseq
  %v548 = vshrl.u32 %v547, 7
  %550 = vset.pattern.permute.xlu0 %v548
  %551 = vperm.xlu0 %550, %v546
  %v552 = vpop.permute.xlu0 %551
  %v553 = vperm.slane %v362, 4
  %v554 = vlaneseq
  %v555 = vshrl.u32 %v554, 7
  %557 = vset.pattern.permute.xlu0 %v555
  %558 = vperm.xlu0 %557, %v553
  %v559 = vpop.permute.xlu0 %558
  %v560 = vperm.slane %v362, 5
  %v561 = vlaneseq
  %v562 = vshrl.u32 %v561, 7
  %564 = vset.pattern.permute.xlu0 %v562
  %565 = vperm.xlu0 %564, %v560
  %v566 = vpop.permute.xlu0 %565
  %vm567 = vcmp.eq.s32.totalorder %v489, %v254
  %vm568 = vcmp.eq.s32.totalorder %v496, %v254
  %vm569 = vcmp.eq.s32.totalorder %v503, %v254
  %vm570 = vcmp.eq.s32.totalorder %v510, %v254
  %vm571 = vcmp.eq.s32.totalorder %v517, %v254
  %vm572 = vcmp.eq.s32.totalorder %v524, %v254
  %vm573 = vcmp.eq.s32.totalorder %v531, %v254
  %vm574 = vcmp.eq.s32.totalorder %v538, %v254
  %vm575 = vcmp.eq.s32.totalorder %v545, %v254
  %vm576 = vcmp.eq.s32.totalorder %v552, %v254
  %vm577 = vcmp.eq.s32.totalorder %v559, %v254
  %vm578 = vcmp.eq.s32.totalorder %v566, %v254
  %v579 = vsel %vm567, 1, 0
  %v580 = vsel %vm568, 1, 0
  %v581 = vsel %vm569, 1, 0
  %v582 = vsel %vm570, 1, 0
  %v583 = vsel %vm571, 1, 0
  %v584 = vsel %vm572, 1, 0
  %v585 = vsel %vm573, 1, 0
  %v586 = vsel %vm574, 1, 0
  %v587 = vsel %vm575, 1, 0
  %v588 = vsel %vm576, 1, 0
  %v589 = vsel %vm577, 1, 0
  %v590 = vsel %vm578, 1, 0
  %v591 = vcvt.s32.f32 %v579
  %v592 = vcvt.s32.f32 %v580
  %v593 = vcvt.s32.f32 %v581
  %v594 = vcvt.s32.f32 %v582
  %v595 = vcvt.s32.f32 %v583
  %v596 = vcvt.s32.f32 %v584
  %v597 = vcvt.s32.f32 %v585
  %v598 = vcvt.s32.f32 %v586
  %v599 = vcvt.s32.f32 %v587
  %v600 = vcvt.s32.f32 %v588
  %v601 = vcvt.s32.f32 %v589
  %v602 = vcvt.s32.f32 %v590
  %v603 = vadd.f32 %v471, %v591
  %v604 = vadd.f32 %v472, %v592
  %v605 = vadd.f32 %v473, %v593
  %v606 = vadd.f32 %v474, %v594
  %v607 = vadd.f32 %v475, %v595
  %v608 = vadd.f32 %v476, %v596
  %v609 = vadd.f32 %v477, %v597
  %v610 = vadd.f32 %v478, %v598
  %v611 = vadd.f32 %v479, %v599
  %v612 = vadd.f32 %v480, %v600
  %v613 = vadd.f32 %v481, %v601
  %v614 = vadd.f32 %v482, %v602
  %v615 = vperm.slane %v343, 0
  %v616 = vlaneseq
  %v617 = vshrl.u32 %v616, 7
  %619 = vset.pattern.permute.xlu0 %v617
  %620 = vperm.xlu0 %619, %v615
  %v621 = vpop.permute.xlu0 %620
  %v622 = vperm.slane %v343, 1
  %v623 = vlaneseq
  %v624 = vshrl.u32 %v623, 7
  %626 = vset.pattern.permute.xlu0 %v624
  %627 = vperm.xlu0 %626, %v622
  %v628 = vpop.permute.xlu0 %627
  %v629 = vperm.slane %v343, 2
  %v630 = vlaneseq
  %v631 = vshrl.u32 %v630, 7
  %633 = vset.pattern.permute.xlu0 %v631
  %634 = vperm.xlu0 %633, %v629
  %v635 = vpop.permute.xlu0 %634
  %v636 = vperm.slane %v343, 3
  %v637 = vlaneseq
  %v638 = vshrl.u32 %v637, 7
  %640 = vset.pattern.permute.xlu0 %v638
  %641 = vperm.xlu0 %640, %v636
  %v642 = vpop.permute.xlu0 %641
  %v643 = vperm.slane %v343, 4
  %v644 = vlaneseq
  %v645 = vshrl.u32 %v644, 7
  %647 = vset.pattern.permute.xlu0 %v645
  %648 = vperm.xlu0 %647, %v643
  %v649 = vpop.permute.xlu0 %648
  %v650 = vperm.slane %v343, 5
  %v651 = vlaneseq
  %v652 = vshrl.u32 %v651, 7
  %654 = vset.pattern.permute.xlu0 %v652
  %655 = vperm.xlu0 %654, %v650
  %v656 = vpop.permute.xlu0 %655
  %v657 = vperm.slane %v358, 0
  %v658 = vlaneseq
  %v659 = vshrl.u32 %v658, 7
  %661 = vset.pattern.permute.xlu0 %v659
  %662 = vperm.xlu0 %661, %v657
  %v663 = vpop.permute.xlu0 %662
  %v664 = vperm.slane %v358, 1
  %v665 = vlaneseq
  %v666 = vshrl.u32 %v665, 7
  %668 = vset.pattern.permute.xlu0 %v666
  %669 = vperm.xlu0 %668, %v664
  %v670 = vpop.permute.xlu0 %669
  %v671 = vperm.slane %v358, 2
  %v672 = vlaneseq
  %v673 = vshrl.u32 %v672, 7
  %675 = vset.pattern.permute.xlu0 %v673
  %676 = vperm.xlu0 %675, %v671
  %v677 = vpop.permute.xlu0 %676
  %v678 = vperm.slane %v358, 3
  %v679 = vlaneseq
  %v680 = vshrl.u32 %v679, 7
  %682 = vset.pattern.permute.xlu0 %v680
  %683 = vperm.xlu0 %682, %v678
  %v684 = vpop.permute.xlu0 %683
  %v685 = vperm.slane %v358, 4
  %v686 = vlaneseq
  %v687 = vshrl.u32 %v686, 7
  %689 = vset.pattern.permute.xlu0 %v687
  %690 = vperm.xlu0 %689, %v685
  %v691 = vpop.permute.xlu0 %690
  %v692 = vperm.slane %v358, 5
  %v693 = vlaneseq
  %v694 = vshrl.u32 %v693, 7
  %696 = vset.pattern.permute.xlu0 %v694
  %697 = vperm.xlu0 %696, %v692
  %v698 = vpop.permute.xlu0 %697
  %v699 = vmul.f32 %v621, %v603
  %v700 = vmul.f32 %v628, %v604
  %v701 = vmul.f32 %v635, %v605
  %v702 = vmul.f32 %v642, %v606
  %v703 = vmul.f32 %v649, %v607
  %v704 = vmul.f32 %v656, %v608
  %v705 = vmul.f32 %v663, %v609
  %v706 = vmul.f32 %v670, %v610
  %v707 = vmul.f32 %v677, %v611
  %v708 = vmul.f32 %v684, %v612
  %v709 = vmul.f32 %v691, %v613
  %v710 = vmul.f32 %v698, %v614
  %vm711 = vcmask 54272
  %v712 = vsel %vm711, %v699, 0.0
  %v713 = vrot.slane %v712, 4
  %v714 = vadd.f32 %v712, %v713
  %v715 = vrot.slane %v714, 2
  %v716 = vadd.f32 %v714, %v715
  %v717 = vrot.slane %v716, 1
  %v718 = vadd.f32 %v716, %v717
  %v719 = vsel %vm711, %v700, 0.0
  %v720 = vrot.slane %v719, 4
  %v721 = vadd.f32 %v719, %v720
  %v722 = vrot.slane %v721, 2
  %v723 = vadd.f32 %v721, %v722
  %v724 = vrot.slane %v723, 1
  %v725 = vadd.f32 %v723, %v724
  %v726 = vsel %vm711, %v701, 0.0
  %v727 = vrot.slane %v726, 4
  %v728 = vadd.f32 %v726, %v727
  %v729 = vrot.slane %v728, 2
  %v730 = vadd.f32 %v728, %v729
  %v731 = vrot.slane %v730, 1
  %v732 = vadd.f32 %v730, %v731
  %v733 = vsel %vm711, %v702, 0.0
  %v734 = vrot.slane %v733, 4
  %v735 = vadd.f32 %v733, %v734
  %v736 = vrot.slane %v735, 2
  %v737 = vadd.f32 %v735, %v736
  %v738 = vrot.slane %v737, 1
  %v739 = vadd.f32 %v737, %v738
  %v740 = vsel %vm711, %v703, 0.0
  %v741 = vrot.slane %v740, 4
  %v742 = vadd.f32 %v740, %v741
  %v743 = vrot.slane %v742, 2
  %v744 = vadd.f32 %v742, %v743
  %v745 = vrot.slane %v744, 1
  %v746 = vadd.f32 %v744, %v745
  %v747 = vsel %vm711, %v704, 0.0
  %v748 = vrot.slane %v747, 4
  %v749 = vadd.f32 %v747, %v748
  %v750 = vrot.slane %v749, 2
  %v751 = vadd.f32 %v749, %v750
  %v752 = vrot.slane %v751, 1
  %v753 = vadd.f32 %v751, %v752
  %v754 = vsel %vm711, %v705, 0.0
  %v755 = vrot.slane %v754, 4
  %v756 = vadd.f32 %v754, %v755
  %v757 = vrot.slane %v756, 2
  %v758 = vadd.f32 %v756, %v757
  %v759 = vrot.slane %v758, 1
  %v760 = vadd.f32 %v758, %v759
  %v761 = vsel %vm711, %v706, 0.0
  %v762 = vrot.slane %v761, 4
  %v763 = vadd.f32 %v761, %v762
  %v764 = vrot.slane %v763, 2
  %v765 = vadd.f32 %v763, %v764
  %v766 = vrot.slane %v765, 1
  %v767 = vadd.f32 %v765, %v766
  %v768 = vsel %vm711, %v707, 0.0
  %v769 = vrot.slane %v768, 4
  %v770 = vadd.f32 %v768, %v769
  %v771 = vrot.slane %v770, 2
  %v772 = vadd.f32 %v770, %v771
  %v773 = vrot.slane %v772, 1
  %v774 = vadd.f32 %v772, %v773
  %v775 = vsel %vm711, %v708, 0.0
  %v776 = vrot.slane %v775, 4
  %v777 = vadd.f32 %v775, %v776
  %v778 = vrot.slane %v777, 2
  %v779 = vadd.f32 %v777, %v778
  %v780 = vrot.slane %v779, 1
  %v781 = vadd.f32 %v779, %v780
  %v782 = vsel %vm711, %v709, 0.0
  %v783 = vrot.slane %v782, 4
  %v784 = vadd.f32 %v782, %v783
  %v785 = vrot.slane %v784, 2
  %v786 = vadd.f32 %v784, %v785
  %v787 = vrot.slane %v786, 1
  %v788 = vadd.f32 %v786, %v787
  %v789 = vsel %vm711, %v710, 0.0
  %v790 = vrot.slane %v789, 4
  %v791 = vadd.f32 %v789, %v790
  %v792 = vrot.slane %v791, 2
  %v793 = vadd.f32 %v791, %v792
  %v794 = vrot.slane %v793, 1
  %v795 = vadd.f32 %v793, %v794
  %v796 = vlaneseq
  %v797 = vshrl.u32 %v796, 7
  %799 = vset.pattern.permute.xlu0 %v797
  %800 = vperm.xlu0 %799, %v718
  %v801 = vpop.permute.xlu0 %800
  %v802 = vlaneseq
  %v803 = vshrl.u32 %v802, 7
  %805 = vset.pattern.permute.xlu0 %v803
  %806 = vperm.xlu0 %805, %v725
  %v807 = vpop.permute.xlu0 %806
  %v808 = vlaneseq
  %v809 = vshrl.u32 %v808, 7
  %811 = vset.pattern.permute.xlu0 %v809
  %812 = vperm.xlu0 %811, %v732
  %v813 = vpop.permute.xlu0 %812
  %v814 = vlaneseq
  %v815 = vshrl.u32 %v814, 7
  %817 = vset.pattern.permute.xlu0 %v815
  %818 = vperm.xlu0 %817, %v739
  %v819 = vpop.permute.xlu0 %818
  %v820 = vlaneseq
  %v821 = vshrl.u32 %v820, 7
  %823 = vset.pattern.permute.xlu0 %v821
  %824 = vperm.xlu0 %823, %v746
  %v825 = vpop.permute.xlu0 %824
  %v826 = vlaneseq
  %v827 = vshrl.u32 %v826, 7
  %829 = vset.pattern.permute.xlu0 %v827
  %830 = vperm.xlu0 %829, %v753
  %v831 = vpop.permute.xlu0 %830
  %v832 = vlaneseq
  %v833 = vshrl.u32 %v832, 7
  %835 = vset.pattern.permute.xlu0 %v833
  %836 = vperm.xlu0 %835, %v760
  %v837 = vpop.permute.xlu0 %836
  %v838 = vlaneseq
  %v839 = vshrl.u32 %v838, 7
  %841 = vset.pattern.permute.xlu0 %v839
  %842 = vperm.xlu0 %841, %v767
  %v843 = vpop.permute.xlu0 %842
  %v844 = vlaneseq
  %v845 = vshrl.u32 %v844, 7
  %847 = vset.pattern.permute.xlu0 %v845
  %848 = vperm.xlu0 %847, %v774
  %v849 = vpop.permute.xlu0 %848
  %v850 = vlaneseq
  %v851 = vshrl.u32 %v850, 7
  %853 = vset.pattern.permute.xlu0 %v851
  %854 = vperm.xlu0 %853, %v781
  %v855 = vpop.permute.xlu0 %854
  %v856 = vlaneseq
  %v857 = vshrl.u32 %v856, 7
  %859 = vset.pattern.permute.xlu0 %v857
  %860 = vperm.xlu0 %859, %v788
  %v861 = vpop.permute.xlu0 %860
  %v862 = vlaneseq
  %v863 = vshrl.u32 %v862, 7
  %865 = vset.pattern.permute.xlu0 %v863
  %866 = vperm.xlu0 %865, %v795
  %v867 = vpop.permute.xlu0 %866
  %v868 = vmul.f32 %v801, %v151
  %v869 = vmul.f32 %v807, %v151
  %v870 = vmul.f32 %v813, %v151
  %v871 = vmul.f32 %v819, %v151
  %v872 = vmul.f32 %v825, %v151
  %v873 = vmul.f32 %v831, %v151
  %v874 = vmul.f32 %v837, %v158
  %v875 = vmul.f32 %v843, %v158
  %v876 = vmul.f32 %v849, %v158
  %v877 = vmul.f32 %v855, %v158
  %v878 = vmul.f32 %v861, %v158
  %v879 = vmul.f32 %v867, %v158
  %vm880 = vcmp.gt.f32.partialorder %v868, 0.0
  %vm881 = vcmp.gt.f32.partialorder %v869, 0.0
  %vm882 = vcmp.gt.f32.partialorder %v870, 0.0
  %vm883 = vcmp.gt.f32.partialorder %v871, 0.0
  %vm884 = vcmp.gt.f32.partialorder %v872, 0.0
  %vm885 = vcmp.gt.f32.partialorder %v873, 0.0
  %vm886 = vcmp.gt.f32.partialorder %v874, 0.0
  %vm887 = vcmp.gt.f32.partialorder %v875, 0.0
  %vm888 = vcmp.gt.f32.partialorder %v876, 0.0
  %vm889 = vcmp.gt.f32.partialorder %v877, 0.0
  %vm890 = vcmp.gt.f32.partialorder %v878, 0.0
  %vm891 = vcmp.gt.f32.partialorder %v879, 0.0
  %v892 = vmul.f32 %v868, 1.442695
  %v893 = vpow.pop %v892
  %v894 = vmul.f32 %v869, 1.442695
  %v895 = vpow.pop %v894
  %v896 = vmul.f32 %v870, 1.442695
  %v897 = vpow.pop %v896
  %v898 = vmul.f32 %v871, 1.442695
  %v899 = vpow.pop %v898
  %v900 = vmul.f32 %v872, 1.442695
  %v901 = vpow.pop %v900
  %v902 = vmul.f32 %v873, 1.442695
  %v903 = vpow.pop %v902
  %v904 = vmul.f32 %v874, 1.442695
  %v905 = vpow.pop %v904
  %v906 = vmul.f32 %v875, 1.442695
  %v907 = vpow.pop %v906
  %v908 = vmul.f32 %v876, 1.442695
  %v909 = vpow.pop %v908
  %v910 = vmul.f32 %v877, 1.442695
  %v911 = vpow.pop %v910
  %v912 = vmul.f32 %v878, 1.442695
  %v913 = vpow.pop %v912
  %v914 = vmul.f32 %v879, 1.442695
  %v915 = vpow.pop %v914
  %v916 = vsub.f32 %v893, 1.0
  %v917 = vsub.f32 %v895, 1.0
  %v918 = vsub.f32 %v897, 1.0
  %v919 = vsub.f32 %v899, 1.0
  %v920 = vsub.f32 %v901, 1.0
  %v921 = vsub.f32 %v903, 1.0
  %v922 = vsub.f32 %v905, 1.0
  %v923 = vsub.f32 %v907, 1.0
  %v924 = vsub.f32 %v909, 1.0
  %v925 = vsub.f32 %v911, 1.0
  %v926 = vsub.f32 %v913, 1.0
  %v927 = vsub.f32 %v915, 1.0
  %v928 = vsel %vm880, %v868, %v916
  %v929 = vsel %vm881, %v869, %v917
  %v930 = vsel %vm882, %v870, %v918
  %v931 = vsel %vm883, %v871, %v919
  %v932 = vsel %vm884, %v872, %v920
  %v933 = vsel %vm885, %v873, %v921
  %v934 = vsel %vm886, %v874, %v922
  %v935 = vsel %vm887, %v875, %v923
  %v936 = vsel %vm888, %v876, %v924
  %v937 = vsel %vm889, %v877, %v925
  %v938 = vsel %vm890, %v878, %v926
  %v939 = vsel %vm891, %v879, %v927
  %vm940 = vcmask 63488
  %941 = vst.msk [vmem:[%s11] sm:$0x7f] %vm940, %v928
  %942 = vst.msk [vmem:[%s11 + $0x8] sm:$0x7f] %vm940, %v929
  %943 = vst.msk [vmem:[%s11 + $0x10] sm:$0x7f] %vm940, %v930
  %944 = vst.msk [vmem:[%s11 + $0x18] sm:$0x7f] %vm940, %v931
  %945 = vst.msk [vmem:[%s11 + $0x20] sm:$0x7f] %vm940, %v932
  %946 = vst.msk [vmem:[%s11 + $0x28] sm:$0x7f] %vm940, %v933
  %947 = vst.msk [vmem:[%s11 + $0x30] sm:$0x7f] %vm940, %v934
  %948 = vst.msk [vmem:[%s11 + $0x38] sm:$0x7f] %vm940, %v935
  %949 = vst.msk [vmem:[%s11 + $0x40] sm:$0x7f] %vm940, %v936
  %950 = vst.msk [vmem:[%s11 + $0x48] sm:$0x7f] %vm940, %v937
  %951 = vst.msk [vmem:[%s11 + $0x50] sm:$0x7f] %vm940, %v938
  %952 = vst.msk [vmem:[%s11 + $0x58] sm:$0x7f] %vm940, %v939
  // Predicated region
  $region46: #{tpu_custom_call.1} parent=0 // pred_check
    _
  $region47: #{tpu_custom_call.1} parent=0 // pred_check_branch
    %954 = sbr.rel (0) target = $region49
  $region48: #{tpu_custom_call.1} parent=0 // pred_region
    _
  $region49: #{tpu_custom_call.1} parent=0 // pred_fallthru
    _
  // Predicated region
  $region50: #{tpu_custom_call.1} parent=0 // pred_check
    _
  $region51: #{tpu_custom_call.1} parent=0 // pred_check_branch
    %956 = sbr.rel (0) target = $region53
  $region52: #{tpu_custom_call.1} parent=0 // pred_region
    _
  $region53: #{tpu_custom_call.1} parent=0 // pred_fallthru
    _

</llo_original>
